<compile_context>
chip_gen: v5e
topology: v5e:2x2
jax: 0.10.0
libtpu: 0.0.40
codegen_flags: <defaults>
</compile_context>

<pallas_src>
import jax
import jax.numpy as jnp
from jax.experimental import pallas as pl
from jax.experimental.pallas import tpu as pltpu


OUT_PAD = 128  # lane-dense padded width of the final layer (logical out_dim = 2)


def _round_up(x, m):
    return (x + m - 1) // m * m


# ----------------------------------------------------------------------------
# Fused MLP kernel: all Linear(+ReLU) layers in one kernel body.
#   refs layout: (x_ref, w0, b0, w1, b1, ..., out_ref)
#   w_i: (d_in, d_out) bf16 [pre-transposed], b_i: (1, d_out) f32
# ----------------------------------------------------------------------------
def _make_mlp_kernel(num_linear):
    def kernel(x_ref, *rest):
        out_ref = rest[-1]
        h = x_ref[...]
        for i in range(num_linear):
            w = rest[2 * i][...]           # bf16 (d_in, d_out)
            b = rest[2 * i + 1][...]       # f32  (1, d_out)
            # bf16 MXU operands, f32 accumulation; bias-add stays f32 (VPU).
            h = jnp.dot(h.astype(jnp.bfloat16), w,
                        preferred_element_type=jnp.float32) + b
            if i < num_linear - 1:
                h = jnp.maximum(h, 0.0)    # ReLU; Dropout is identity at inference
        out_ref[...] = h.astype(out_ref.dtype)
    return kernel


def mlp_forward(x, params, *, tile_b=512):
    """x: (B, window_size, input_dim) (or any (B, ...)); returns (B, out_dim) logits."""
    B = x.shape[0]
    x_flat = x.reshape(B, -1)              # keep original dtype (no wrapper upcast)
    F = x_flat.shape[1]

    weights = params["weights"]            # list of bf16 (d_in, d_out); last padded to OUT_PAD
    biases = params["biases"]              # list of f32 (1, d_out)
    out_dim = params["out_dim"]            # logical output width (2)
    num_linear = len(weights)
    assert weights[0].shape[0] == F, "flatten_dim mismatch"
    out_pad = weights[-1].shape[1]

    # --- Batch tiling: pad to a sublane multiple, prefer >=2 parallel grid steps. ---
    B8 = _round_up(B, 8)
    if B8 <= tile_b:
        tb = B8 if B8 < 16 else _round_up(B8 // 2, 8)   # split across 2 TCs when possible
    else:
        tb = tile_b
    B_pad = _round_up(B8, tb)
    if B_pad != B:
        x_flat = jnp.pad(x_flat, ((0, B_pad - B), (0, 0)))
    grid = (B_pad // tb,)

    wb_args = []
    for w, b in zip(weights, biases):
        wb_args += [w, b]

    # --- Explicit VMEM budget (v7x has only 64 MiB physical / 32 MiB scoped default). ---
    wb_bytes = sum(int(a.size) * a.dtype.itemsize for a in wb_args)      # resident weights/biases
    x_bytes = 2 * tb * F * x_flat.dtype.itemsize                          # double-buffered input tile
    out_bytes = 2 * tb * out_pad * 4                                      # double-buffered output tile
    vmem_bytes = int(wb_bytes + x_bytes + out_bytes) + (4 << 20)          # + headroom
    vmem_bytes = min(max(vmem_bytes, 8 << 20), 64 << 20)

    def _run(weight_pipeline_mode):
        in_specs = [pl.BlockSpec((tb, F), lambda i: (i, 0))]
        for arr in wb_args:
            if weight_pipeline_mode is None:
                spec = pl.BlockSpec(arr.shape, lambda i: (0, 0))
            else:
                spec = pl.BlockSpec(arr.shape, lambda i: (0, 0),
                                    pipeline_mode=weight_pipeline_mode)
            in_specs.append(spec)
        return pl.pallas_call(
            _make_mlp_kernel(num_linear),
            out_shape=jax.ShapeDtypeStruct((B_pad, out_pad), jnp.float32),
            grid=grid,
            in_specs=in_specs,
            out_specs=pl.BlockSpec((tb, out_pad), lambda i: (i, 0)),
            compiler_params=pltpu.CompilerParams(
                dimension_semantics=("parallel",),
                vmem_limit_bytes=vmem_bytes),
        )(x_flat, *wb_args)

    try:
        out = _run(pl.Buffered(1))         # constant blocks -> single-buffer weights
    except Exception:
        # TODO(synk): single-buffered weight specs unsupported on this jax version;
        # falling back to default double-buffering.
        out = _run(None)

    return out[:B, :out_dim]


# ----------------------------------------------------------------------------
# Pure-JAX reference mirroring the kernel numerics (bf16 operands, f32 accum).
# ----------------------------------------------------------------------------
def reference_forward(x, params):
    B = x.shape[0]
    h = x.reshape(B, -1).astype(jnp.float32)
    n = len(params["weights"])
    for i, (w, b) in enumerate(zip(params["weights"], params["biases"])):
        h = jnp.dot(h.astype(jnp.bfloat16), w,
                    preferred_element_type=jnp.float32) + b
        if i < n - 1:
            h = jnp.maximum(h, 0.0)
    return h[:, :params["out_dim"]]


# ----------------------------------------------------------------------------
# Parameter init (PyTorch nn.Linear default: U(-1/sqrt(fan_in), 1/sqrt(fan_in)))
# Weights stored PRE-TRANSPOSED as (in, out) in bf16; biases as (1, out) f32.
# The final layer is zero-padded along its output dim to OUT_PAD lanes.
# ----------------------------------------------------------------------------
def init_params(key, input_dim, window_size, hidden_dim, num_layers=2, out_dim=2):
    if num_layers < 1:
        raise ValueError("MLP must have at least one layer")
    flatten_dim = input_dim * window_size
    dims = []
    cur = flatten_dim
    if num_layers == 1:
        dims.append((cur, out_dim))
    else:
        for _ in range(num_layers - 1):
            dims.append((cur, hidden_dim))
            cur = hidden_dim
        dims.append((cur, out_dim))

    weights, biases = [], []
    for li, (d_in, d_out) in enumerate(dims):
        key, kw, kb = jax.random.split(key, 3)
        bound = 1.0 / (float(d_in) ** 0.5)
        # PyTorch weight is (d_out, d_in); we store its transpose (d_in, d_out).
        w = jax.random.uniform(kw, (d_in, d_out), jnp.float32, -bound, bound)
        b = jax.random.uniform(kb, (1, d_out), jnp.float32, -bound, bound)
        if li == len(dims) - 1 and d_out < OUT_PAD:
            w = jnp.pad(w, ((0, 0), (0, OUT_PAD - d_out)))   # lane-dense final layer
            b = jnp.pad(b, ((0, 0), (0, OUT_PAD - d_out)))
        weights.append(w.astype(jnp.bfloat16))               # bf16 MXU operands
        biases.append(b.astype(jnp.float32))                 # f32 bias-add on the VPU
    return {"weights": weights, "biases": biases, "out_dim": out_dim}


if __name__ == "__main__":
    # Small shapes consistent with the module: batch=2, window_size=8,
    # input_dim=16 (flatten_dim=128, lane-aligned), hidden=128, 2 layers.
    B, W, D, H, L = 2, 8, 16, 128, 2

    key = jax.random.PRNGKey(0)
    key, kx = jax.random.split(key)
    x = jax.random.normal(kx, (B, W, D), jnp.float32)
    params = init_params(key, D, W, H, L)

    logits = mlp_forward(x, params)
    logits = jax.block_until_ready(logits)

    assert logits.shape == (B, 2)

    ref = reference_forward(x, params)
    assert jnp.allclose(logits, ref, rtol=2e-2, atol=2e-2)

    print("KERNEL_OK")
</pallas_src>

<mosaic_0001>
module attributes {stable_mosaic.version = 11 : i64} {
  func.func @kernel(%arg0: i32, %arg1: memref<8x128xf32, #tpu.memory_space<vmem>>, %arg2: memref<128x128xbf16, #tpu.memory_space<vmem>>, %arg3: memref<1x128xf32, #tpu.memory_space<vmem>>, %arg4: memref<128x128xbf16, #tpu.memory_space<vmem>>, %arg5: memref<1x128xf32, #tpu.memory_space<vmem>>, %arg6: memref<8x128xf32, #tpu.memory_space<vmem>>) attributes {dimension_semantics = [#tpu.dimension_semantics<parallel>], iteration_bounds = array<i64: 1>, scalar_prefetch = 0 : i64, scratch_operands = 0 : i64, tpu.core_type = #tpu.core_type<tc>, window_params = [{transform_indices = @transform_0, window_bounds = array<i64: 8, 128>}, {pipeline_mode = #tpu.pipeline_mode<synchronous>, transform_indices = @transform_1, window_bounds = array<i64: 128, 128>}, {pipeline_mode = #tpu.pipeline_mode<synchronous>, transform_indices = @transform_2, window_bounds = array<i64: 1, 128>}, {pipeline_mode = #tpu.pipeline_mode<synchronous>, transform_indices = @transform_3, window_bounds = array<i64: 128, 128>}, {pipeline_mode = #tpu.pipeline_mode<synchronous>, transform_indices = @transform_4, window_bounds = array<i64: 1, 128>}, {transform_indices = @transform_5, window_bounds = array<i64: 8, 128>}]} {
    %c0 = arith.constant 0 : index
    %c0_0 = arith.constant 0 : index
    %0 = vector.load %arg1[%c0, %c0_0] : memref<8x128xf32, #tpu.memory_space<vmem>>, vector<8x128xf32>
    %c0_1 = arith.constant 0 : index
    %c0_2 = arith.constant 0 : index
    %1 = vector.load %arg2[%c0_1, %c0_2] : memref<128x128xbf16, #tpu.memory_space<vmem>>, vector<128x128xbf16>
    %c0_3 = arith.constant 0 : index
    %c0_4 = arith.constant 0 : index
    %2 = vector.load %arg3[%c0_3, %c0_4] : memref<1x128xf32, #tpu.memory_space<vmem>>, vector<1x128xf32>
    %3 = arith.truncf %0 : vector<8x128xf32> to vector<8x128xbf16>
    %cst = arith.constant dense<0.000000e+00> : vector<8x128xf32>
    %4 = tpu.matmul %3, %1, %cst {dimension_numbers = #tpu.dot_dimension_numbers<[1], [0], [0], [1], [0, 0, 1, 1], [], []>} : vector<8x128xbf16>, vector<128x128xbf16>, vector<8x128xf32> -> vector<8x128xf32>
    %5 = vector.broadcast %2 : vector<1x128xf32> to vector<8x128xf32>
    %6 = arith.addf %4, %5 : vector<8x128xf32>
    %cst_5 = arith.constant 0.000000e+00 : f32
    %7 = vector.broadcast %cst_5 : f32 to vector<8x128xf32>
    %8 = arith.maximumf %6, %7 : vector<8x128xf32>
    %c0_6 = arith.constant 0 : index
    %c0_7 = arith.constant 0 : index
    %9 = vector.load %arg4[%c0_6, %c0_7] : memref<128x128xbf16, #tpu.memory_space<vmem>>, vector<128x128xbf16>
    %c0_8 = arith.constant 0 : index
    %c0_9 = arith.constant 0 : index
    %10 = vector.load %arg5[%c0_8, %c0_9] : memref<1x128xf32, #tpu.memory_space<vmem>>, vector<1x128xf32>
    %11 = arith.truncf %8 : vector<8x128xf32> to vector<8x128xbf16>
    %cst_10 = arith.constant dense<0.000000e+00> : vector<8x128xf32>
    %12 = tpu.matmul %11, %9, %cst_10 {dimension_numbers = #tpu.dot_dimension_numbers<[1], [0], [0], [1], [0, 0, 1, 1], [], []>} : vector<8x128xbf16>, vector<128x128xbf16>, vector<8x128xf32> -> vector<8x128xf32>
    %13 = vector.broadcast %10 : vector<1x128xf32> to vector<8x128xf32>
    %14 = arith.addf %12, %13 : vector<8x128xf32>
    %c0_11 = arith.constant 0 : index
    %c0_12 = arith.constant 0 : index
    %15 = vector.load %arg6[%c0_11, %c0_12] : memref<8x128xf32, #tpu.memory_space<vmem>>, vector<8x128xf32>
    tpu.vector_store %arg6[%c0_11, %c0_12], %14 {strides = array<i32>} : memref<8x128xf32, #tpu.memory_space<vmem>>, vector<8x128xf32>,
    return
  }
  func.func @transform_0(%arg0: i32) -> (i32, i32) {
    %c0_i32 = arith.constant 0 : i32
    %c0_i32_0 = arith.constant 0 : i32
    return %arg0, %c0_i32 : i32, i32
  }
  func.func @transform_1(%arg0: i32) -> (i32, i32) {
    %c0_i32 = arith.constant 0 : i32
    %c0_i32_0 = arith.constant 0 : i32
    %c0_i32_1 = arith.constant 0 : i32
    return %c0_i32, %c0_i32_0 : i32, i32
  }
  func.func @transform_2(%arg0: i32) -> (i32, i32) {
    %c0_i32 = arith.constant 0 : i32
    %c0_i32_0 = arith.constant 0 : i32
    %c0_i32_1 = arith.constant 0 : i32
    return %c0_i32, %c0_i32_0 : i32, i32
  }
  func.func @transform_3(%arg0: i32) -> (i32, i32) {
    %c0_i32 = arith.constant 0 : i32
    %c0_i32_0 = arith.constant 0 : i32
    %c0_i32_1 = arith.constant 0 : i32
    return %c0_i32, %c0_i32_0 : i32, i32
  }
  func.func @transform_4(%arg0: i32) -> (i32, i32) {
    %c0_i32 = arith.constant 0 : i32
    %c0_i32_0 = arith.constant 0 : i32
    %c0_i32_1 = arith.constant 0 : i32
    return %c0_i32, %c0_i32_0 : i32, i32
  }
  func.func @transform_5(%arg0: i32) -> (i32, i32) {
    %c0_i32 = arith.constant 0 : i32
    %c0_i32_0 = arith.constant 0 : i32
    return %arg0, %c0_i32 : i32, i32
  }
}

module attributes {stable_mosaic.version = 11 : i64} {
  func.func @kernel(%arg0: i32, %arg1: memref<8x128xf32, #tpu.memory_space<vmem>>, %arg2: memref<128x128xbf16, #tpu.memory_space<vmem>>, %arg3: memref<1x128xf32, #tpu.memory_space<vmem>>, %arg4: memref<128x128xbf16, #tpu.memory_space<vmem>>, %arg5: memref<1x128xf32, #tpu.memory_space<vmem>>, %arg6: memref<8x128xf32, #tpu.memory_space<vmem>>) attributes {dimension_semantics = [#tpu.dimension_semantics<parallel>], iteration_bounds = array<i64: 1>, scalar_prefetch = 0 : i64, scratch_operands = 0 : i64, tpu.core_type = #tpu.core_type<tc>, window_params = [{transform_indices = @transform_0, window_bounds = array<i64: 8, 128>}, {pipeline_mode = #tpu.pipeline_mode<synchronous>, transform_indices = @transform_1, window_bounds = array<i64: 128, 128>}, {pipeline_mode = #tpu.pipeline_mode<synchronous>, transform_indices = @transform_2, window_bounds = array<i64: 1, 128>}, {pipeline_mode = #tpu.pipeline_mode<synchronous>, transform_indices = @transform_3, window_bounds = array<i64: 128, 128>}, {pipeline_mode = #tpu.pipeline_mode<synchronous>, transform_indices = @transform_4, window_bounds = array<i64: 1, 128>}, {transform_indices = @transform_5, window_bounds = array<i64: 8, 128>}]} {
    %c0 = arith.constant 0 : index
    %c0_0 = arith.constant 0 : index
    %0 = vector.load %arg1[%c0, %c0_0] : memref<8x128xf32, #tpu.memory_space<vmem>>, vector<8x128xf32>
    %c0_1 = arith.constant 0 : index
    %c0_2 = arith.constant 0 : index
    %1 = vector.load %arg2[%c0_1, %c0_2] : memref<128x128xbf16, #tpu.memory_space<vmem>>, vector<128x128xbf16>
    %c0_3 = arith.constant 0 : index
    %c0_4 = arith.constant 0 : index
    %2 = vector.load %arg3[%c0_3, %c0_4] : memref<1x128xf32, #tpu.memory_space<vmem>>, vector<1x128xf32>
    %3 = arith.truncf %0 : vector<8x128xf32> to vector<8x128xbf16>
    %cst = arith.constant dense<0.000000e+00> : vector<8x128xf32>
    %4 = tpu.matmul %3, %1, %cst {dimension_numbers = #tpu.dot_dimension_numbers<[1], [0], [0], [1], [0, 0, 1, 1], [], []>} : vector<8x128xbf16>, vector<128x128xbf16>, vector<8x128xf32> -> vector<8x128xf32>
    %5 = vector.broadcast %2 : vector<1x128xf32> to vector<8x128xf32>
    %6 = arith.addf %4, %5 : vector<8x128xf32>
    %cst_5 = arith.constant 0.000000e+00 : f32
    %7 = vector.broadcast %cst_5 : f32 to vector<8x128xf32>
    %8 = arith.maximumf %6, %7 : vector<8x128xf32>
    %c0_6 = arith.constant 0 : index
    %c0_7 = arith.constant 0 : index
    %9 = vector.load %arg4[%c0_6, %c0_7] : memref<128x128xbf16, #tpu.memory_space<vmem>>, vector<128x128xbf16>
    %c0_8 = arith.constant 0 : index
    %c0_9 = arith.constant 0 : index
    %10 = vector.load %arg5[%c0_8, %c0_9] : memref<1x128xf32, #tpu.memory_space<vmem>>, vector<1x128xf32>
    %11 = arith.truncf %8 : vector<8x128xf32> to vector<8x128xbf16>
    %cst_10 = arith.constant dense<0.000000e+00> : vector<8x128xf32>
    %12 = tpu.matmul %11, %9, %cst_10 {dimension_numbers = #tpu.dot_dimension_numbers<[1], [0], [0], [1], [0, 0, 1, 1], [], []>} : vector<8x128xbf16>, vector<128x128xbf16>, vector<8x128xf32> -> vector<8x128xf32>
    %13 = vector.broadcast %10 : vector<1x128xf32> to vector<8x128xf32>
    %14 = arith.addf %12, %13 : vector<8x128xf32>
    %c0_11 = arith.constant 0 : index
    %c0_12 = arith.constant 0 : index
    %15 = vector.load %arg6[%c0_11, %c0_12] : memref<8x128xf32, #tpu.memory_space<vmem>>, vector<8x128xf32>
    tpu.vector_store %arg6[%c0_11, %c0_12], %14 {strides = array<i32>} : memref<8x128xf32, #tpu.memory_space<vmem>>, vector<8x128xf32>,
    return
  }
  func.func @transform_0(%arg0: i32) -> (i32, i32) {
    %c0_i32 = arith.constant 0 : i32
    %c0_i32_0 = arith.constant 0 : i32
    return %arg0, %c0_i32 : i32, i32
  }
  func.func @transform_1(%arg0: i32) -> (i32, i32) {
    %c0_i32 = arith.constant 0 : i32
    %c0_i32_0 = arith.constant 0 : i32
    %c0_i32_1 = arith.constant 0 : i32
    return %c0_i32, %c0_i32_0 : i32, i32
  }
  func.func @transform_2(%arg0: i32) -> (i32, i32) {
    %c0_i32 = arith.constant 0 : i32
    %c0_i32_0 = arith.constant 0 : i32
    %c0_i32_1 = arith.constant 0 : i32
    return %c0_i32, %c0_i32_0 : i32, i32
  }
  func.func @transform_3(%arg0: i32) -> (i32, i32) {
    %c0_i32 = arith.constant 0 : i32
    %c0_i32_0 = arith.constant 0 : i32
    %c0_i32_1 = arith.constant 0 : i32
    return %c0_i32, %c0_i32_0 : i32, i32
  }
  func.func @transform_4(%arg0: i32) -> (i32, i32) {
    %c0_i32 = arith.constant 0 : i32
    %c0_i32_0 = arith.constant 0 : i32
    %c0_i32_1 = arith.constant 0 : i32
    return %c0_i32, %c0_i32_0 : i32, i32
  }
  func.func @transform_5(%arg0: i32) -> (i32, i32) {
    %c0_i32 = arith.constant 0 : i32
    %c0_i32_0 = arith.constant 0 : i32
    return %arg0, %c0_i32 : i32, i32
  }
}

</mosaic_0001>

<llo_original>
// kernel: tpu_custom_call.1
$region0: #{tpu_custom_call.1}
  #allocation0 [shape = 'u32[]', space=smem, size = 0x4, offset = 0x4, fixed_abs, tag = 'smem constant byte address 0x4 - core index']
  #allocation1 [shape = 'u32[72,128]{1,0:T(1,128)}', space=vmem, size = 0x9000, scoped, tag = 'internal scratch']
  %s0 = inlined_call_operand.hbm [shape: f32[8,128], index: 0, kind: input, shape index: {}]
  %s1 = inlined_call_operand.hbm [shape: bf16[128,128], index: 1, kind: input, shape index: {}]
  %s2 = inlined_call_operand.vmem [shape: f32[1,128], index: 2, kind: input, shape index: {}]
  %s3 = inlined_call_operand.hbm [shape: bf16[128,128], index: 3, kind: input, shape index: {}]
  %s4 = inlined_call_operand.vmem [shape: f32[1,128], index: 4, kind: input, shape index: {}]
  %s5 = inlined_call_operand.hbm [shape: f32[8,128], index: 5, kind: output, shape index: {}]
  %s6 = sld [smem:[#allocation0]]
  $region42: #{tpu_custom_call.1} parent=0
    _
  %s8 = ssub.s32 1, %s6
  %s9 = scalar_select 0, %s8, %s6
  $region1: #{tpu_custom_call.1} parent=0
    #allocation2 [shape = 'u8[4096]{0}', space=vmem, size = 0x1000, scoped, tag = 'input window, operand 0, single buffered']
    #allocation3 [shape = 's32[1]{0}', space=sflag, size = 0x4, scoped, tag = 'scoped memory for tpu_custom_call.1']
    #allocation4 [shape = 's32[1]{0}', space=sflag, size = 0x4, scoped, tag = 'scoped memory for tpu_custom_call.1']
    #allocation5 [shape = 'u8[32768]{0}', space=vmem, size = 0x8000, scoped, tag = 'input window, operand 1, single buffered']
    #allocation6 [shape = 's32[1]{0}', space=sflag, size = 0x4, scoped, tag = 'scoped memory for tpu_custom_call.1']
    #allocation7 [shape = 'u8[32768]{0}', space=vmem, size = 0x8000, scoped, tag = 'input window, operand 3, single buffered']
    #allocation8 [shape = 'u8[4096]{0}', space=vmem, size = 0x1000, scoped, tag = 'output window, operand 0, single buffered']
    %10 = vsyncpa [#allocation3], 0
    %11 = vsyncpa [#allocation6], 0
    %12 = vsyncpa [#allocation4], 0
    // Predicated region
    $region2: #{tpu_custom_call.1} parent=1 // pred_check
      _
    $region3: #{tpu_custom_call.1} parent=1 // pred_check_branch
      %14 = sbr.rel (0) target = $region5
    $region4: #{tpu_custom_call.1} parent=1 // pred_region
      %16 = vsyncadd [#allocation3], 0
      %s18 = sshll.u32 %s0, 4
      %s19 = int_to_ptr.hbm [resolvable:$true] %s18
      %s20 = sshll.u32 [#allocation2], 4
      %s21 = int_to_ptr.vmem [resolvable:$true] %s20
      %23 = dma.hbm_to_vmem [thread:$0]  %s19, 128, %s21, [#allocation3]
    $region5: #{tpu_custom_call.1} parent=1 // pred_fallthru
      _
    // Predicated region
    $region6: #{tpu_custom_call.1} parent=1 // pred_check
      _
    $region7: #{tpu_custom_call.1} parent=1 // pred_check_branch
      %25 = sbr.rel (0) target = $region9
    $region8: #{tpu_custom_call.1} parent=1 // pred_region
      %27 = vsyncadd [#allocation6], 0
      %s28 = sshll.u32 %s1, 4
      %s29 = int_to_ptr.hbm [resolvable:$true] %s28
      %s30 = sshll.u32 [#allocation5], 4
      %s31 = int_to_ptr.vmem [resolvable:$true] %s30
      %36 = dma.hbm_to_vmem [thread:$0]  %s29, 1024, %s31, [#allocation6], 64, 64, 4
    $region9: #{tpu_custom_call.1} parent=1 // pred_fallthru
      _
    // Predicated region
    $region10: #{tpu_custom_call.1} parent=1 // pred_check
      _
    $region11: #{tpu_custom_call.1} parent=1 // pred_check_branch
      %38 = sbr.rel (0) target = $region13
    $region12: #{tpu_custom_call.1} parent=1 // pred_region
      _
    $region13: #{tpu_custom_call.1} parent=1 // pred_fallthru
      _
    // Predicated region
    $region14: #{tpu_custom_call.1} parent=1 // pred_check
      _
    $region15: #{tpu_custom_call.1} parent=1 // pred_check_branch
      %40 = sbr.rel (0) target = $region17
    $region16: #{tpu_custom_call.1} parent=1 // pred_region
      %42 = vsyncadd [#allocation6], 0
      %s43 = sshll.u32 %s3, 4
      %s44 = int_to_ptr.hbm [resolvable:$true] %s43
      %s45 = sshll.u32 [#allocation7], 4
      %s46 = int_to_ptr.vmem [resolvable:$true] %s45
      %51 = dma.hbm_to_vmem [thread:$0]  %s44, 1024, %s46, [#allocation6], 64, 64, 4
    $region17: #{tpu_custom_call.1} parent=1 // pred_fallthru
      _
    // Predicated region
    $region18: #{tpu_custom_call.1} parent=1 // pred_check
      _
    $region19: #{tpu_custom_call.1} parent=1 // pred_check_branch
      %53 = sbr.rel (0) target = $region21
    $region20: #{tpu_custom_call.1} parent=1 // pred_region
      _
    $region21: #{tpu_custom_call.1} parent=1 // pred_fallthru
      _
    // Predicated region
    $region22: #{tpu_custom_call.1} parent=1 // pred_check
      _
    $region23: #{tpu_custom_call.1} parent=1 // pred_check_branch
      %55 = sbr.rel (0) target = $region25
    $region24: #{tpu_custom_call.1} parent=1 // pred_region
      %57 = dma.done [#allocation3], 128
    $region25: #{tpu_custom_call.1} parent=1 // pred_fallthru
      _
    // Predicated region
    $region26: #{tpu_custom_call.1} parent=1 // pred_check
      _
    $region27: #{tpu_custom_call.1} parent=1 // pred_check_branch
      %59 = sbr.rel (0) target = $region29
    $region28: #{tpu_custom_call.1} parent=1 // pred_region
      %61 = dma.done [#allocation6], 1024
    $region29: #{tpu_custom_call.1} parent=1 // pred_fallthru
      _
    // Predicated region
    $region30: #{tpu_custom_call.1} parent=1 // pred_check
      _
    $region31: #{tpu_custom_call.1} parent=1 // pred_check_branch
      %63 = sbr.rel (0) target = $region33
    $region32: #{tpu_custom_call.1} parent=1 // pred_region
      %65 = dma.done [#allocation6], 1024
    $region33: #{tpu_custom_call.1} parent=1 // pred_fallthru
      _
    %v66 = vld [vmem:[#allocation2] sm:$0xff]
    %v67 = vld [vmem:[#allocation5] sm:$0xf]
    %v68 = vld [vmem:[#allocation5 + $0x4] sm:$0xf]
    %v69 = vld [vmem:[#allocation5 + $0x8] sm:$0xf]
    %v70 = vld [vmem:[#allocation5 + $0xc] sm:$0xf]
    %v71 = vld [vmem:[#allocation5 + $0x10] sm:$0xf]
    %v72 = vld [vmem:[#allocation5 + $0x14] sm:$0xf]
    %v73 = vld [vmem:[#allocation5 + $0x18] sm:$0xf]
    %v74 = vld [vmem:[#allocation5 + $0x1c] sm:$0xf]
    %v75 = vld [vmem:[#allocation5 + $0x20] sm:$0xf]
    %v76 = vld [vmem:[#allocation5 + $0x24] sm:$0xf]
    %v77 = vld [vmem:[#allocation5 + $0x28] sm:$0xf]
    %v78 = vld [vmem:[#allocation5 + $0x2c] sm:$0xf]
    %v79 = vld [vmem:[#allocation5 + $0x30] sm:$0xf]
    %v80 = vld [vmem:[#allocation5 + $0x34] sm:$0xf]
    %v81 = vld [vmem:[#allocation5 + $0x38] sm:$0xf]
    %v82 = vld [vmem:[#allocation5 + $0x3c] sm:$0xf]
    %v83 = vld [vmem:[%s2] sm:$0x1]
    %v84 = vpack.c.bf16 %v66, %v66
    %v86 = vperm.slane %v83, 0
    %v104 = vunpack.c.l.b16 %v67
    %v105 = vunpack.c.l.b16 %v68
    %v106 = vunpack.c.l.b16 %v69
    %v107 = vunpack.c.l.b16 %v70
    %v108 = vunpack.c.l.b16 %v71
    %v109 = vunpack.c.l.b16 %v72
    %v110 = vunpack.c.l.b16 %v73
    %v111 = vunpack.c.l.b16 %v74
    %v112 = vunpack.c.l.b16 %v75
    %v113 = vunpack.c.l.b16 %v76
    %v114 = vunpack.c.l.b16 %v77
    %v115 = vunpack.c.l.b16 %v78
    %v116 = vunpack.c.l.b16 %v79
    %v117 = vunpack.c.l.b16 %v80
    %v118 = vunpack.c.l.b16 %v81
    %v119 = vunpack.c.l.b16 %v82
    %v120 = vpack.c.b16 %v105, %v104
    %v121 = vpack.c.b16 %v107, %v106
    %v122 = vpack.c.b16 %v109, %v108
    %v123 = vpack.c.b16 %v111, %v110
    %v124 = vpack.c.b16 %v113, %v112
    %v125 = vpack.c.b16 %v115, %v114
    %v126 = vpack.c.b16 %v117, %v116
    %v127 = vpack.c.b16 %v119, %v118
    %136 = vmatpush.bf16.msra.mxu0 %v127
    %137 = vmatpush.bf16.msra.mxu0 %v126
    %138 = vmatpush.bf16.msra.mxu0 %v125
    %139 = vmatpush.bf16.msra.mxu0 %v124
    %140 = vmatpush.bf16.msra.mxu0 %v123
    %141 = vmatpush.bf16.msra.mxu0 %v122
    %142 = vmatpush.bf16.msra.mxu0 %v121
    %143 = vmatpush.bf16.msra.mxu0 %v120
    %144 = vmatmul.bf16.gmra.mxu0 %v84
    %v145 = vpop.f32.mrf.mxu0
    %v146 = vadd.f32 %v86, %v145
    %v147 = vpop.f32.mrf.mxu0
    %148 = vdwg.mxu0
    %v149 = vmax.f32 %v146, 0.0
    %v150 = vld [vmem:[#allocation7] sm:$0xf]
    %v151 = vld [vmem:[#allocation7 + $0x4] sm:$0xf]
    %v152 = vld [vmem:[#allocation7 + $0x8] sm:$0xf]
    %v153 = vld [vmem:[#allocation7 + $0xc] sm:$0xf]
    %v154 = vld [vmem:[#allocation7 + $0x10] sm:$0xf]
    %v155 = vld [vmem:[#allocation7 + $0x14] sm:$0xf]
    %v156 = vld [vmem:[#allocation7 + $0x18] sm:$0xf]
    %v157 = vld [vmem:[#allocation7 + $0x1c] sm:$0xf]
    %v158 = vld [vmem:[#allocation7 + $0x20] sm:$0xf]
    %v159 = vld [vmem:[#allocation7 + $0x24] sm:$0xf]
    %v160 = vld [vmem:[#allocation7 + $0x28] sm:$0xf]
    %v161 = vld [vmem:[#allocation7 + $0x2c] sm:$0xf]
    %v162 = vld [vmem:[#allocation7 + $0x30] sm:$0xf]
    %v163 = vld [vmem:[#allocation7 + $0x34] sm:$0xf]
    %v164 = vld [vmem:[#allocation7 + $0x38] sm:$0xf]
    %v165 = vld [vmem:[#allocation7 + $0x3c] sm:$0xf]
    %v166 = vld [vmem:[%s4] sm:$0x1]
    %v167 = vpack.c.bf16 %v149, %v149
    %v169 = vperm.slane %v166, 0
    %v187 = vunpack.c.l.b16 %v150
    %v188 = vunpack.c.l.b16 %v151
    %v189 = vunpack.c.l.b16 %v152
    %v190 = vunpack.c.l.b16 %v153
    %v191 = vunpack.c.l.b16 %v154
    %v192 = vunpack.c.l.b16 %v155
    %v193 = vunpack.c.l.b16 %v156
    %v194 = vunpack.c.l.b16 %v157
    %v195 = vunpack.c.l.b16 %v158
    %v196 = vunpack.c.l.b16 %v159
    %v197 = vunpack.c.l.b16 %v160
    %v198 = vunpack.c.l.b16 %v161
    %v199 = vunpack.c.l.b16 %v162
    %v200 = vunpack.c.l.b16 %v163
    %v201 = vunpack.c.l.b16 %v164
    %v202 = vunpack.c.l.b16 %v165
    %v203 = vpack.c.b16 %v188, %v187
    %v204 = vpack.c.b16 %v190, %v189
    %v205 = vpack.c.b16 %v192, %v191
    %v206 = vpack.c.b16 %v194, %v193
    %v207 = vpack.c.b16 %v196, %v195
    %v208 = vpack.c.b16 %v198, %v197
    %v209 = vpack.c.b16 %v200, %v199
    %v210 = vpack.c.b16 %v202, %v201
    %219 = vmatpush.bf16.msra.mxu0 %v210
    %220 = vmatpush.bf16.msra.mxu0 %v209
    %221 = vmatpush.bf16.msra.mxu0 %v208
    %222 = vmatpush.bf16.msra.mxu0 %v207
    %223 = vmatpush.bf16.msra.mxu0 %v206
    %224 = vmatpush.bf16.msra.mxu0 %v205
    %225 = vmatpush.bf16.msra.mxu0 %v204
    %226 = vmatpush.bf16.msra.mxu0 %v203
    %227 = vmatmul.bf16.gmra.mxu0 %v167
    %v228 = vpop.f32.mrf.mxu0
    %v229 = vadd.f32 %v169, %v228
    %v230 = vpop.f32.mrf.mxu0
    %231 = vdwg.mxu0
    %232 = vst [vmem:[#allocation8] sm:$0xff] %v229
    // Predicated region
    $region34: #{tpu_custom_call.1} parent=1 // pred_check
      _
    $region35: #{tpu_custom_call.1} parent=1 // pred_check_branch
      %234 = sbr.rel (0) target = $region37
    $region36: #{tpu_custom_call.1} parent=1 // pred_region
      %236 = vsyncadd [#allocation4], 0
      %s238 = sshll.u32 [#allocation8], 4
      %s239 = int_to_ptr.vmem [resolvable:$true] %s238
      %s240 = sshll.u32 %s5, 4
      %s241 = int_to_ptr.hbm [resolvable:$true] %s240
      %243 = dma.vmem_to_hbm [thread:$0]  %s239, 128, %s241, [#allocation4]
    $region37: #{tpu_custom_call.1} parent=1 // pred_fallthru
      _
    // Predicated region
    $region38: #{tpu_custom_call.1} parent=1 // pred_check
      _
    $region39: #{tpu_custom_call.1} parent=1 // pred_check_branch
      %245 = sbr.rel (0) target = $region41
    $region40: #{tpu_custom_call.1} parent=1 // pred_region
      %247 = dma.done [#allocation4], 128
    $region41: #{tpu_custom_call.1} parent=1 // pred_fallthru
      _
    %248 = vsyncpa [#allocation3], 1
    %249 = vsyncpa [#allocation6], 1
    %250 = vsyncpa [#allocation4], 1

// kernel: tpu_custom_call.1
$region0: #{tpu_custom_call.1}
  #allocation0 [shape = 'u32[]', space=smem, size = 0x4, offset = 0x4, fixed_abs, tag = 'smem constant byte address 0x4 - core index']
  #allocation1 [shape = 'u32[72,128]{1,0:T(1,128)}', space=vmem, size = 0x9000, scoped, tag = 'internal scratch']
  %s0 = inlined_call_operand.hbm [shape: f32[8,128], index: 0, kind: input, shape index: {}]
  %s1 = inlined_call_operand.hbm [shape: bf16[128,128], index: 1, kind: input, shape index: {}]
  %s2 = inlined_call_operand.vmem [shape: f32[1,128], index: 2, kind: input, shape index: {}]
  %s3 = inlined_call_operand.hbm [shape: bf16[128,128], index: 3, kind: input, shape index: {}]
  %s4 = inlined_call_operand.vmem [shape: f32[1,128], index: 4, kind: input, shape index: {}]
  %s5 = inlined_call_operand.hbm [shape: f32[8,128], index: 5, kind: output, shape index: {}]
  %s6 = sld [smem:[#allocation0]]
  $region42: #{tpu_custom_call.1} parent=0
    _
  %s8 = ssub.s32 1, %s6
  %s9 = scalar_select 0, %s8, %s6
  $region1: #{tpu_custom_call.1} parent=0
    #allocation2 [shape = 'u8[4096]{0}', space=vmem, size = 0x1000, scoped, tag = 'input window, operand 0, single buffered']
    #allocation3 [shape = 's32[1]{0}', space=sflag, size = 0x4, scoped, tag = 'scoped memory for tpu_custom_call.1']
    #allocation4 [shape = 's32[1]{0}', space=sflag, size = 0x4, scoped, tag = 'scoped memory for tpu_custom_call.1']
    #allocation5 [shape = 'u8[32768]{0}', space=vmem, size = 0x8000, scoped, tag = 'input window, operand 1, single buffered']
    #allocation6 [shape = 's32[1]{0}', space=sflag, size = 0x4, scoped, tag = 'scoped memory for tpu_custom_call.1']
    #allocation7 [shape = 'u8[32768]{0}', space=vmem, size = 0x8000, scoped, tag = 'input window, operand 3, single buffered']
    #allocation8 [shape = 'u8[4096]{0}', space=vmem, size = 0x1000, scoped, tag = 'output window, operand 0, single buffered']
    %10 = vsyncpa [#allocation3], 0
    %11 = vsyncpa [#allocation6], 0
    %12 = vsyncpa [#allocation4], 0
    // Predicated region
    $region2: #{tpu_custom_call.1} parent=1 // pred_check
      _
    $region3: #{tpu_custom_call.1} parent=1 // pred_check_branch
      %14 = sbr.rel (0) target = $region5
    $region4: #{tpu_custom_call.1} parent=1 // pred_region
      %16 = vsyncadd [#allocation3], 0
      %s18 = sshll.u32 %s0, 4
      %s19 = int_to_ptr.hbm [resolvable:$true] %s18
      %s20 = sshll.u32 [#allocation2], 4
      %s21 = int_to_ptr.vmem [resolvable:$true] %s20
      %23 = dma.hbm_to_vmem [thread:$0]  %s19, 128, %s21, [#allocation3]
    $region5: #{tpu_custom_call.1} parent=1 // pred_fallthru
      _
    // Predicated region
    $region6: #{tpu_custom_call.1} parent=1 // pred_check
      _
    $region7: #{tpu_custom_call.1} parent=1 // pred_check_branch
      %25 = sbr.rel (0) target = $region9
    $region8: #{tpu_custom_call.1} parent=1 // pred_region
      %27 = vsyncadd [#allocation6], 0
      %s28 = sshll.u32 %s1, 4
      %s29 = int_to_ptr.hbm [resolvable:$true] %s28
      %s30 = sshll.u32 [#allocation5], 4
      %s31 = int_to_ptr.vmem [resolvable:$true] %s30
      %36 = dma.hbm_to_vmem [thread:$0]  %s29, 1024, %s31, [#allocation6], 64, 64, 4
    $region9: #{tpu_custom_call.1} parent=1 // pred_fallthru
      _
    // Predicated region
    $region10: #{tpu_custom_call.1} parent=1 // pred_check
      _
    $region11: #{tpu_custom_call.1} parent=1 // pred_check_branch
      %38 = sbr.rel (0) target = $region13
    $region12: #{tpu_custom_call.1} parent=1 // pred_region
      _
    $region13: #{tpu_custom_call.1} parent=1 // pred_fallthru
      _
    // Predicated region
    $region14: #{tpu_custom_call.1} parent=1 // pred_check
      _
    $region15: #{tpu_custom_call.1} parent=1 // pred_check_branch
      %40 = sbr.rel (0) target = $region17
    $region16: #{tpu_custom_call.1} parent=1 // pred_region
      %42 = vsyncadd [#allocation6], 0
      %s43 = sshll.u32 %s3, 4
      %s44 = int_to_ptr.hbm [resolvable:$true] %s43
      %s45 = sshll.u32 [#allocation7], 4
      %s46 = int_to_ptr.vmem [resolvable:$true] %s45
      %51 = dma.hbm_to_vmem [thread:$0]  %s44, 1024, %s46, [#allocation6], 64, 64, 4
    $region17: #{tpu_custom_call.1} parent=1 // pred_fallthru
      _
    // Predicated region
    $region18: #{tpu_custom_call.1} parent=1 // pred_check
      _
    $region19: #{tpu_custom_call.1} parent=1 // pred_check_branch
      %53 = sbr.rel (0) target = $region21
    $region20: #{tpu_custom_call.1} parent=1 // pred_region
      _
    $region21: #{tpu_custom_call.1} parent=1 // pred_fallthru
      _
    // Predicated region
    $region22: #{tpu_custom_call.1} parent=1 // pred_check
      _
    $region23: #{tpu_custom_call.1} parent=1 // pred_check_branch
      %55 = sbr.rel (0) target = $region25
    $region24: #{tpu_custom_call.1} parent=1 // pred_region
      %57 = dma.done [#allocation3], 128
    $region25: #{tpu_custom_call.1} parent=1 // pred_fallthru
      _
    // Predicated region
    $region26: #{tpu_custom_call.1} parent=1 // pred_check
      _
    $region27: #{tpu_custom_call.1} parent=1 // pred_check_branch
      %59 = sbr.rel (0) target = $region29
    $region28: #{tpu_custom_call.1} parent=1 // pred_region
      %61 = dma.done [#allocation6], 1024
    $region29: #{tpu_custom_call.1} parent=1 // pred_fallthru
      _
    // Predicated region
    $region30: #{tpu_custom_call.1} parent=1 // pred_check
      _
    $region31: #{tpu_custom_call.1} parent=1 // pred_check_branch
      %63 = sbr.rel (0) target = $region33
    $region32: #{tpu_custom_call.1} parent=1 // pred_region
      %65 = dma.done [#allocation6], 1024
    $region33: #{tpu_custom_call.1} parent=1 // pred_fallthru
      _
    %v66 = vld [vmem:[#allocation2] sm:$0xff]
    %v67 = vld [vmem:[#allocation5] sm:$0xf]
    %v68 = vld [vmem:[#allocation5 + $0x4] sm:$0xf]
    %v69 = vld [vmem:[#allocation5 + $0x8] sm:$0xf]
    %v70 = vld [vmem:[#allocation5 + $0xc] sm:$0xf]
    %v71 = vld [vmem:[#allocation5 + $0x10] sm:$0xf]
    %v72 = vld [vmem:[#allocation5 + $0x14] sm:$0xf]
    %v73 = vld [vmem:[#allocation5 + $0x18] sm:$0xf]
    %v74 = vld [vmem:[#allocation5 + $0x1c] sm:$0xf]
    %v75 = vld [vmem:[#allocation5 + $0x20] sm:$0xf]
    %v76 = vld [vmem:[#allocation5 + $0x24] sm:$0xf]
    %v77 = vld [vmem:[#allocation5 + $0x28] sm:$0xf]
    %v78 = vld [vmem:[#allocation5 + $0x2c] sm:$0xf]
    %v79 = vld [vmem:[#allocation5 + $0x30] sm:$0xf]
    %v80 = vld [vmem:[#allocation5 + $0x34] sm:$0xf]
    %v81 = vld [vmem:[#allocation5 + $0x38] sm:$0xf]
    %v82 = vld [vmem:[#allocation5 + $0x3c] sm:$0xf]
    %v83 = vld [vmem:[%s2] sm:$0x1]
    %v84 = vpack.c.bf16 %v66, %v66
    %v86 = vperm.slane %v83, 0
    %v104 = vunpack.c.l.b16 %v67
    %v105 = vunpack.c.l.b16 %v68
    %v106 = vunpack.c.l.b16 %v69
    %v107 = vunpack.c.l.b16 %v70
    %v108 = vunpack.c.l.b16 %v71
    %v109 = vunpack.c.l.b16 %v72
    %v110 = vunpack.c.l.b16 %v73
    %v111 = vunpack.c.l.b16 %v74
    %v112 = vunpack.c.l.b16 %v75
    %v113 = vunpack.c.l.b16 %v76
    %v114 = vunpack.c.l.b16 %v77
    %v115 = vunpack.c.l.b16 %v78
    %v116 = vunpack.c.l.b16 %v79
    %v117 = vunpack.c.l.b16 %v80
    %v118 = vunpack.c.l.b16 %v81
    %v119 = vunpack.c.l.b16 %v82
    %v120 = vpack.c.b16 %v105, %v104
    %v121 = vpack.c.b16 %v107, %v106
    %v122 = vpack.c.b16 %v109, %v108
    %v123 = vpack.c.b16 %v111, %v110
    %v124 = vpack.c.b16 %v113, %v112
    %v125 = vpack.c.b16 %v115, %v114
    %v126 = vpack.c.b16 %v117, %v116
    %v127 = vpack.c.b16 %v119, %v118
    %136 = vmatpush.bf16.msra.mxu0 %v127
    %137 = vmatpush.bf16.msra.mxu0 %v126
    %138 = vmatpush.bf16.msra.mxu0 %v125
    %139 = vmatpush.bf16.msra.mxu0 %v124
    %140 = vmatpush.bf16.msra.mxu0 %v123
    %141 = vmatpush.bf16.msra.mxu0 %v122
    %142 = vmatpush.bf16.msra.mxu0 %v121
    %143 = vmatpush.bf16.msra.mxu0 %v120
    %144 = vmatmul.bf16.gmra.mxu0 %v84
    %v145 = vpop.f32.mrf.mxu0
    %v146 = vadd.f32 %v86, %v145
    %v147 = vpop.f32.mrf.mxu0
    %148 = vdwg.mxu0
    %v149 = vmax.f32 %v146, 0.0
    %v150 = vld [vmem:[#allocation7] sm:$0xf]
    %v151 = vld [vmem:[#allocation7 + $0x4] sm:$0xf]
    %v152 = vld [vmem:[#allocation7 + $0x8] sm:$0xf]
    %v153 = vld [vmem:[#allocation7 + $0xc] sm:$0xf]
    %v154 = vld [vmem:[#allocation7 + $0x10] sm:$0xf]
    %v155 = vld [vmem:[#allocation7 + $0x14] sm:$0xf]
    %v156 = vld [vmem:[#allocation7 + $0x18] sm:$0xf]
    %v157 = vld [vmem:[#allocation7 + $0x1c] sm:$0xf]
    %v158 = vld [vmem:[#allocation7 + $0x20] sm:$0xf]
    %v159 = vld [vmem:[#allocation7 + $0x24] sm:$0xf]
    %v160 = vld [vmem:[#allocation7 + $0x28] sm:$0xf]
    %v161 = vld [vmem:[#allocation7 + $0x2c] sm:$0xf]
    %v162 = vld [vmem:[#allocation7 + $0x30] sm:$0xf]
    %v163 = vld [vmem:[#allocation7 + $0x34] sm:$0xf]
    %v164 = vld [vmem:[#allocation7 + $0x38] sm:$0xf]
    %v165 = vld [vmem:[#allocation7 + $0x3c] sm:$0xf]
    %v166 = vld [vmem:[%s4] sm:$0x1]
    %v167 = vpack.c.bf16 %v149, %v149
    %v169 = vperm.slane %v166, 0
    %v187 = vunpack.c.l.b16 %v150
    %v188 = vunpack.c.l.b16 %v151
    %v189 = vunpack.c.l.b16 %v152
    %v190 = vunpack.c.l.b16 %v153
    %v191 = vunpack.c.l.b16 %v154
    %v192 = vunpack.c.l.b16 %v155
    %v193 = vunpack.c.l.b16 %v156
    %v194 = vunpack.c.l.b16 %v157
    %v195 = vunpack.c.l.b16 %v158
    %v196 = vunpack.c.l.b16 %v159
    %v197 = vunpack.c.l.b16 %v160
    %v198 = vunpack.c.l.b16 %v161
    %v199 = vunpack.c.l.b16 %v162
    %v200 = vunpack.c.l.b16 %v163
    %v201 = vunpack.c.l.b16 %v164
    %v202 = vunpack.c.l.b16 %v165
    %v203 = vpack.c.b16 %v188, %v187
    %v204 = vpack.c.b16 %v190, %v189
    %v205 = vpack.c.b16 %v192, %v191
    %v206 = vpack.c.b16 %v194, %v193
    %v207 = vpack.c.b16 %v196, %v195
    %v208 = vpack.c.b16 %v198, %v197
    %v209 = vpack.c.b16 %v200, %v199
    %v210 = vpack.c.b16 %v202, %v201
    %219 = vmatpush.bf16.msra.mxu0 %v210
    %220 = vmatpush.bf16.msra.mxu0 %v209
    %221 = vmatpush.bf16.msra.mxu0 %v208
    %222 = vmatpush.bf16.msra.mxu0 %v207
    %223 = vmatpush.bf16.msra.mxu0 %v206
    %224 = vmatpush.bf16.msra.mxu0 %v205
    %225 = vmatpush.bf16.msra.mxu0 %v204
    %226 = vmatpush.bf16.msra.mxu0 %v203
    %227 = vmatmul.bf16.gmra.mxu0 %v167
    %v228 = vpop.f32.mrf.mxu0
    %v229 = vadd.f32 %v169, %v228
    %v230 = vpop.f32.mrf.mxu0
    %231 = vdwg.mxu0
    %232 = vst [vmem:[#allocation8] sm:$0xff] %v229
    // Predicated region
    $region34: #{tpu_custom_call.1} parent=1 // pred_check
      _
    $region35: #{tpu_custom_call.1} parent=1 // pred_check_branch
      %234 = sbr.rel (0) target = $region37
    $region36: #{tpu_custom_call.1} parent=1 // pred_region
      %236 = vsyncadd [#allocation4], 0
      %s238 = sshll.u32 [#allocation8], 4
      %s239 = int_to_ptr.vmem [resolvable:$true] %s238
      %s240 = sshll.u32 %s5, 4
      %s241 = int_to_ptr.hbm [resolvable:$true] %s240
      %243 = dma.vmem_to_hbm [thread:$0]  %s239, 128, %s241, [#allocation4]
    $region37: #{tpu_custom_call.1} parent=1 // pred_fallthru
      _
    // Predicated region
    $region38: #{tpu_custom_call.1} parent=1 // pred_check
      _
    $region39: #{tpu_custom_call.1} parent=1 // pred_check_branch
      %245 = sbr.rel (0) target = $region41
    $region40: #{tpu_custom_call.1} parent=1 // pred_region
      %247 = dma.done [#allocation4], 128
    $region41: #{tpu_custom_call.1} parent=1 // pred_fallthru
      _
    %248 = vsyncpa [#allocation3], 1
    %249 = vsyncpa [#allocation6], 1
    %250 = vsyncpa [#allocation4], 1

</llo_original>
